<compile_context>
chip_gen: v7x
topology: tpu7x:2x2x1
jax: 0.10.0
libtpu: 0.0.40
codegen_flags: <defaults>
</compile_context>

<pallas_src>
import jax
import jax.numpy as jnp
from jax.experimental import pallas as pl
from jax.experimental.pallas import tpu as pltpu

LANE = 128

# A row tile (bf16, double-buffered) budget and resident-H (bf16, x2) budget.
_A_TILE_VMEM_BUDGET = 16 * 1024 * 1024
_H_RESIDENT_VMEM_BUDGET = 12 * 1024 * 1024
_CONV_VMEM_LIMIT = 48 * 1024 * 1024   # below v7x physical 64 MiB, above 32 MiB default


def _round_up(x, m):
    return ((x + m - 1) // m) * m


def _choose_row_tile(n_real):
    """Largest row tile (multiple of 16, <= 512) whose bf16 adjacency row tile
    fits the double-buffered VMEM budget."""
    tm = min(512, _round_up(n_real, 16))
    while tm > 16:
        np_ = _round_up(n_real, tm)
        if tm * np_ * 2 * 2 <= _A_TILE_VMEM_BUDGET:
            break
        tm //= 2
    return tm


# ----------------------------------------------------------------------------
# Kernel 1: per-node-type Linear + ReLU projection   y = relu(x @ W + b)
#           row-tiled, lane-dense (hidden padded to 128) output.
# ----------------------------------------------------------------------------
def _lin_relu_kernel(x_ref, w_ref, b_ref, o_ref):
    y = jnp.dot(x_ref[...], w_ref[...], preferred_element_type=jnp.float32)
    y = y + b_ref[...]
    o_ref[...] = jnp.maximum(y, 0.0).astype(o_ref.dtype)


def linear_relu(x, w, b, tm):
    """x: [Npad, in_dim] (Npad % tm == 0); w: [in_dim, hidden_pad]; b: [1, hidden_pad]."""
    n, in_dim = x.shape
    hidden = w.shape[1]
    return pl.pallas_call(
        _lin_relu_kernel,
        out_shape=jax.ShapeDtypeStruct((n, hidden), jnp.float32),
        grid=(n // tm,),
        in_specs=[
            pl.BlockSpec((tm, in_dim), lambda i: (i, 0)),
            pl.BlockSpec((in_dim, hidden), lambda i: (0, 0)),
            pl.BlockSpec((1, hidden), lambda i: (0, 0)),
        ],
        out_specs=pl.BlockSpec((tm, hidden), lambda i: (i, 0)),
        compiler_params=pltpu.CompilerParams(dimension_semantics=("parallel",)),
    )(x, w, b)


# ----------------------------------------------------------------------------
# Kernel 2: per-relation message projection   H[r] = x @ W_r   (bf16 output)
#           Hoisted out of the aggregation so the N^2 matmul only sees Cout.
# ----------------------------------------------------------------------------
def _project_kernel(x_ref, w_ref, h_ref):
    h_ref[...] = jnp.dot(
        x_ref[...], w_ref[...], preferred_element_type=jnp.float32
    ).astype(h_ref.dtype)


def project_messages(x, w, tm):
    """x: [Np, Cin_p] f32; w: [R, Cin_p, Cp] f32 -> H: [R, Np, Cp] bf16."""
    num_rel, cin, cp = w.shape
    np_ = x.shape[0]
    return pl.pallas_call(
        _project_kernel,
        out_shape=jax.ShapeDtypeStruct((num_rel, np_, cp), jnp.bfloat16),
        grid=(np_ // tm, num_rel),
        in_specs=[
            pl.BlockSpec((tm, cin), lambda i, r: (i, 0)),
            pl.BlockSpec((None, cin, cp), lambda i, r: (r, 0, 0)),
        ],
        out_specs=pl.BlockSpec((None, tm, cp), lambda i, r: (r, i, 0)),
        compiler_params=pltpu.CompilerParams(
            dimension_semantics=("parallel", "parallel")
        ),
    )(x, w)


# ----------------------------------------------------------------------------
# Kernel 3: RGCNConv aggregation.
#   grid = (Np//TM, R)   row-tile axis parallel, relation axis arbitrary (reduction)
#   step (i, r):  acc_tile += A_r[rows i] @ H_r        (bf16 MXU, f32 accumulator)
#   r == 0     :  acc_tile  = x_tile @ root   (or zeros when root_weight=False)
#   r == R - 1 :  optional ReLU, write out tile.
#   H is either a single grid-invariant VMEM block (indexed h_ref[r] inside the
#   kernel -> fetched from HBM once) or streamed per relation (fallback).
# ----------------------------------------------------------------------------
def _make_conv_kernel(apply_relu, has_root, h_resident):
    def _finalize(acc_ref, o_ref):
        out = acc_ref[...]
        if apply_relu:
            out = jnp.maximum(out, 0.0)
        o_ref[...] = out.astype(o_ref.dtype)

    if has_root:
        def kernel(a_ref, h_ref, x_ref, root_ref, o_ref, acc_ref):
            r = pl.program_id(1)

            @pl.when(r == 0)
            def _():
                acc_ref[...] = jnp.dot(
                    x_ref[...], root_ref[...], preferred_element_type=jnp.float32
                )

            h = h_ref[r] if h_resident else h_ref[...]
            acc_ref[...] += jnp.dot(
                a_ref[...], h, preferred_element_type=jnp.float32
            )

            @pl.when(r == pl.num_programs(1) - 1)
            def _():
                _finalize(acc_ref, o_ref)
    else:
        def kernel(a_ref, h_ref, o_ref, acc_ref):
            r = pl.program_id(1)

            @pl.when(r == 0)
            def _():
                acc_ref[...] = jnp.zeros_like(acc_ref)

            h = h_ref[r] if h_resident else h_ref[...]
            acc_ref[...] += jnp.dot(
                a_ref[...], h, preferred_element_type=jnp.float32
            )

            @pl.when(r == pl.num_programs(1) - 1)
            def _():
                _finalize(acc_ref, o_ref)

    return kernel


def rgcn_conv(adj, h, x, root, tm, *, apply_relu):
    """adj: [R, Np, Np] bf16 normalized adjacency (dst, src); h: [R, Np, Cp] bf16;
    x: [Np, Cin_p] f32 (only used if root is not None); root: [Cin_p, Cp] f32 or None."""
    num_rel, np_, _ = adj.shape
    cp = h.shape[2]
    cin = x.shape[1]
    has_root = root is not None
    n_tiles = np_ // tm

    # Keep all relations' projected messages resident in VMEM when they fit:
    # they are then DMA'd from HBM exactly once instead of once per row tile.
    h_resident = (num_rel * np_ * cp * 2) * 2 <= _H_RESIDENT_VMEM_BUDGET
    if h_resident:
        h_spec = pl.BlockSpec((num_rel, np_, cp), lambda i, r: (0, 0, 0))
        h_bytes = num_rel * np_ * cp * 2
    else:
        h_spec = pl.BlockSpec((None, np_, cp), lambda i, r: (r, 0, 0))
        h_bytes = n_tiles * num_rel * np_ * cp * 2

    in_specs = [
        pl.BlockSpec((None, tm, np_), lambda i, r: (r, i, 0)),   # A_r row tile
        h_spec,                                                   # projected messages
    ]
    operands = [adj, h]
    if has_root:
        in_specs += [
            pl.BlockSpec((tm, cin), lambda i, r: (i, 0)),        # x row tile (per i only)
            pl.BlockSpec((cin, cp), lambda i, r: (0, 0)),        # root weight (resident)
        ]
        operands += [x, root]

    flops = 2 * num_rel * np_ * np_ * cp
    bytes_accessed = (
        num_rel * np_ * np_ * 2              # adjacency (bf16)
        + h_bytes                            # projected messages (bf16)
        + np_ * cp * 4                       # output (f32)
    )
    if has_root:
        flops += 2 * np_ * cin * cp
        bytes_accessed += np_ * cin * 4 + cin * cp * 4

    return pl.pallas_call(
        _make_conv_kernel(apply_relu, has_root, h_resident),
        out_shape=jax.ShapeDtypeStruct((np_, cp), jnp.float32),
        grid=(n_tiles, num_rel),
        in_specs=in_specs,
        out_specs=pl.BlockSpec((tm, cp), lambda i, r: (i, 0)),
        scratch_shapes=[pltpu.VMEM((tm, cp), jnp.float32)],
        compiler_params=pltpu.CompilerParams(
            dimension_semantics=("parallel", "arbitrary"),
            vmem_limit_bytes=_CONV_VMEM_LIMIT,
        ),
        cost_estimate=pl.CostEstimate(
            flops=int(flops), transcendentals=0, bytes_accessed=int(bytes_accessed)
        ),
    )(*operands)


# ----------------------------------------------------------------------------
# Glue: normalized per-relation dense adjacency (mean aggregation), bf16.
# ----------------------------------------------------------------------------
def build_norm_adj(edge_index, edge_type, num_nodes_padded, num_relations):
    src = edge_index[0]
    dst = edge_index[1]
    adj = jnp.zeros((num_relations, num_nodes_padded, num_nodes_padded), jnp.float32)
    adj = adj.at[edge_type, dst, src].add(1.0)
    deg = adj.sum(axis=-1, keepdims=True)  # per-relation in-degree of each dst
    adj = jnp.where(deg > 0, adj / jnp.maximum(deg, 1.0), 0.0)
    return adj.astype(jnp.bfloat16)


def compose_basis_weights(comp, basis):
    # W_r = sum_b comp[r, b] * basis[b]   -> [R, Cin_p, Cp]  (tiny; done once per layer)
    return jnp.einsum("rb,bio->rio", comp, basis)


# ----------------------------------------------------------------------------
# Full RGCN forward.
# ----------------------------------------------------------------------------
def rgcn_forward(params, x_dict, node_types, edge_index, edge_type, num_relations,
                 hidden_dim, out_dim):
    # 1. per-node-type projection + relu (row-tiled Pallas kernel, padded cols = 0)
    projected = []
    for nt in node_types:
        w, b = params["lin"][nt]
        x_t = x_dict[nt]
        n_t = x_t.shape[0]
        tm_t = min(256, _round_up(n_t, 8))
        n_pad_t = _round_up(n_t, tm_t)
        x_p = jnp.pad(x_t, ((0, n_pad_t - n_t), (0, 0)))
        y = linear_relu(x_p, w, b, tm_t)[:n_t]
        projected.append(y)
    x = jnp.concatenate(projected, axis=0)  # [N, hidden_pad] f32
    n_real = x.shape[0]

    # pad node axis to a multiple of the conv row tile (multiple of 16 for bf16 A)
    tm = _choose_row_tile(n_real)
    np_ = _round_up(n_real, tm)
    x = jnp.pad(x, ((0, np_ - n_real), (0, 0)))

    adj = build_norm_adj(edge_index, edge_type, np_, num_relations)  # [R, Np, Np] bf16

    x_latents = [x[:n_real, :hidden_dim]]
    num_convs = len(params["convs"])
    for li, conv_p in enumerate(params["convs"]):
        w = compose_basis_weights(conv_p["comp"], conv_p["basis"])   # [R, Cin_p, Cp]
        root = conv_p["root"]                                        # [Cin_p, Cp] or None
        is_last = li == num_convs - 1
        h = project_messages(x, w, tm)                               # [R, Np, Cp] bf16
        x = rgcn_conv(adj, h, x, root, tm, apply_relu=not is_last)   # [Np, Cp] f32
        if not is_last:
            # dropout is identity in eval mode
            x_latents.append(x[:n_real, :hidden_dim])
    return x[:n_real, :out_dim], x_latents


# ----------------------------------------------------------------------------
# Deterministic parameter init (logical shapes match module; padded to 128 lanes).
# ----------------------------------------------------------------------------
def init_params(key, node_in_dims, hidden_dim, out_dim, num_relations, num_bases,
                num_layers):
    hp = _round_up(hidden_dim, LANE)
    op = _round_up(out_dim, LANE)
    params = {"lin": {}, "convs": []}
    keys = jax.random.split(key, 64)
    ki = 0
    for nt, in_dim in node_in_dims.items():
        w = jax.random.normal(keys[ki], (in_dim, hidden_dim), jnp.float32) * 0.1
        b = jax.random.normal(keys[ki + 1], (1, hidden_dim), jnp.float32) * 0.01
        params["lin"][nt] = (
            jnp.pad(w, ((0, 0), (0, hp - hidden_dim))),
            jnp.pad(b, ((0, 0), (0, hp - hidden_dim))),
        )
        ki += 2

    # conv0: hidden->hidden, no root; conv1..: hidden->hidden, root; last: hidden->out, root
    conv_dims = [(hidden_dim, hidden_dim, hp, hp, False)]
    for _ in range(num_layers - 1):
        conv_dims.append((hidden_dim, hidden_dim, hp, hp, True))
    conv_dims.append((hidden_dim, out_dim, hp, op, True))

    for (c_in, c_out, cip, cop, has_root) in conv_dims:
        basis = jax.random.normal(keys[ki], (num_bases, c_in, c_out), jnp.float32) * 0.1
        comp = jax.random.normal(keys[ki + 1], (num_relations, num_bases), jnp.float32) * 0.5
        basis = jnp.pad(basis, ((0, 0), (0, cip - c_in), (0, cop - c_out)))
        root = None
        if has_root:
            root = jax.random.normal(keys[ki + 2], (c_in, c_out), jnp.float32) * 0.1
            root = jnp.pad(root, ((0, cip - c_in), (0, cop - c_out)))
        params["convs"].append({"basis": basis, "comp": comp, "root": root})
        ki += 3
    return params


if __name__ == "__main__":
    key = jax.random.PRNGKey(0)

    # metadata
    node_types = ["paper", "author"]
    edge_types = [("paper", "cites", "paper"),
                  ("paper", "written_by", "author"),
                  ("author", "writes", "paper")]
    num_relations = len(edge_types)

    hidden_dim = 32
    out_dim = 16
    num_bases = 4
    num_layers = 2

    node_counts = {"paper": 10, "author": 6}
    node_in_dims = {"paper": 24, "author": 40}
    num_nodes = sum(node_counts.values())

    k_feat, k_edge, k_param = jax.random.split(key, 3)
    fkeys = jax.random.split(k_feat, len(node_types))
    x_dict = {
        nt: jax.random.normal(fk, (node_counts[nt], node_in_dims[nt]), jnp.float32)
        for nt, fk in zip(node_types, fkeys)
    }

    num_edges = 48
    ek1, ek2, ek3 = jax.random.split(k_edge, 3)
    edge_index = jnp.stack([
        jax.random.randint(ek1, (num_edges,), 0, num_nodes),
        jax.random.randint(ek2, (num_edges,), 0, num_nodes),
    ])
    edge_type = jax.random.randint(ek3, (num_edges,), 0, num_relations)

    params = init_params(k_param, node_in_dims, hidden_dim, out_dim,
                         num_relations, num_bases, num_layers)

    out, x_latents = rgcn_forward(params, x_dict, node_types,
                                  edge_index, edge_type, num_relations,
                                  hidden_dim, out_dim)
    jax.block_until_ready(out)
    for xl in x_latents:
        jax.block_until_ready(xl)

    assert out.shape == (num_nodes, out_dim)
    assert len(x_latents) == num_layers + 1
    assert all(xl.shape == (num_nodes, hidden_dim) for xl in x_latents)
    print("KERNEL_OK")
</pallas_src>

<mosaic_0001>
module attributes {stable_mosaic.version = 11 : i64} {
  func.func @_lin_relu_kernel(%arg0: i32, %arg1: memref<16x24xf32, #tpu.memory_space<vmem>>, %arg2: memref<24x128xf32, #tpu.memory_space<vmem>>, %arg3: memref<1x128xf32, #tpu.memory_space<vmem>>, %arg4: memref<16x128xf32, #tpu.memory_space<vmem>>) attributes {dimension_semantics = [#tpu.dimension_semantics<parallel>], iteration_bounds = array<i64: 1>, scalar_prefetch = 0 : i64, scratch_operands = 0 : i64, tpu.core_type = #tpu.core_type<tc>, window_params = [{transform_indices = @transform_0, window_bounds = array<i64: 16, 24>}, {pipeline_mode = #tpu.pipeline_mode<synchronous>, transform_indices = @transform_1, window_bounds = array<i64: 24, 128>}, {pipeline_mode = #tpu.pipeline_mode<synchronous>, transform_indices = @transform_2, window_bounds = array<i64: 1, 128>}, {transform_indices = @transform_3, window_bounds = array<i64: 16, 128>}]} {
    %c0 = arith.constant 0 : index
    %c0_0 = arith.constant 0 : index
    %0 = vector.load %arg1[%c0, %c0_0] : memref<16x24xf32, #tpu.memory_space<vmem>>, vector<16x24xf32>
    %c0_1 = arith.constant 0 : index
    %c0_2 = arith.constant 0 : index
    %1 = vector.load %arg2[%c0_1, %c0_2] : memref<24x128xf32, #tpu.memory_space<vmem>>, vector<24x128xf32>
    %cst = arith.constant dense<0.000000e+00> : vector<16x128xf32>
    %2 = tpu.matmul %0, %1, %cst {dimension_numbers = #tpu.dot_dimension_numbers<[1], [0], [0], [1], [0, 0, 1, 1], [], []>} : vector<16x24xf32>, vector<24x128xf32>, vector<16x128xf32> -> vector<16x128xf32>
    %c0_3 = arith.constant 0 : index
    %c0_4 = arith.constant 0 : index
    %3 = vector.load %arg3[%c0_3, %c0_4] : memref<1x128xf32, #tpu.memory_space<vmem>>, vector<1x128xf32>
    %4 = vector.broadcast %3 : vector<1x128xf32> to vector<16x128xf32>
    %5 = arith.addf %2, %4 : vector<16x128xf32>
    %cst_5 = arith.constant 0.000000e+00 : f32
    %6 = vector.broadcast %cst_5 : f32 to vector<16x128xf32>
    %7 = arith.maximumf %5, %6 : vector<16x128xf32>
    %c0_6 = arith.constant 0 : index
    %c0_7 = arith.constant 0 : index
    %8 = vector.load %arg4[%c0_6, %c0_7] : memref<16x128xf32, #tpu.memory_space<vmem>>, vector<16x128xf32>
    tpu.vector_store %arg4[%c0_6, %c0_7], %7 {strides = array<i32>} : memref<16x128xf32, #tpu.memory_space<vmem>>, vector<16x128xf32>,
    return
  }
  func.func @transform_0(%arg0: i32) -> (i32, i32) {
    %c0_i32 = arith.constant 0 : i32
    %c0_i32_0 = arith.constant 0 : i32
    return %arg0, %c0_i32 : i32, i32
  }
  func.func @transform_1(%arg0: i32) -> (i32, i32) {
    %c0_i32 = arith.constant 0 : i32
    %c0_i32_0 = arith.constant 0 : i32
    %c0_i32_1 = arith.constant 0 : i32
    return %c0_i32, %c0_i32_0 : i32, i32
  }
  func.func @transform_2(%arg0: i32) -> (i32, i32) {
    %c0_i32 = arith.constant 0 : i32
    %c0_i32_0 = arith.constant 0 : i32
    %c0_i32_1 = arith.constant 0 : i32
    return %c0_i32, %c0_i32_0 : i32, i32
  }
  func.func @transform_3(%arg0: i32) -> (i32, i32) {
    %c0_i32 = arith.constant 0 : i32
    %c0_i32_0 = arith.constant 0 : i32
    return %arg0, %c0_i32 : i32, i32
  }
}

</mosaic_0001>

<llo_original>
// kernel: tpu_custom_call.1
$region0: #{tpu_custom_call.1}
  #allocation0 [shape = 'u32[]', space=smem, size = 0x4, offset = 0x4, fixed_abs, tag = 'smem constant byte address 0x4 - core index']
  #allocation1 [shape = 'u32[144,128]{1,0:T(1,128)}', space=vmem, size = 0x12000, scoped, tag = 'internal scratch']
  %s0 = inlined_call_operand.hbm [shape: f32[16,24], index: 0, kind: input, shape index: {}]
  %s1 = inlined_call_operand.hbm [shape: f32[24,128], index: 1, kind: input, shape index: {}]
  %s2 = inlined_call_operand.vmem [shape: f32[1,128], index: 2, kind: input, shape index: {}]
  %s3 = inlined_call_operand.hbm [shape: f32[16,128], index: 3, kind: output, shape index: {}]
  %s4 = sld [smem:[#allocation0]]
  $region30: #{tpu_custom_call.1} parent=0
    _
  %s6 = ssub.s32 1, %s4
  %s7 = scalar_select 0, %s6, %s4
  $region1: #{tpu_custom_call.1} parent=0
    #allocation2 [shape = 'u8[8192]{0}', space=vmem, size = 0x2000, scoped, tag = 'input window, operand 0, single buffered']
    #allocation3 [shape = 's32[1]{0}', space=sflag, size = 0x4, scoped, tag = 'scoped memory for tpu_custom_call.1']
    #allocation4 [shape = 's32[1]{0}', space=sflag, size = 0x4, scoped, tag = 'scoped memory for tpu_custom_call.1']
    #allocation5 [shape = 'u8[12288]{0}', space=vmem, size = 0x3000, scoped, tag = 'input window, operand 1, single buffered']
    #allocation6 [shape = 's32[1]{0}', space=sflag, size = 0x4, scoped, tag = 'scoped memory for tpu_custom_call.1']
    #allocation7 [shape = 'u8[8192]{0}', space=vmem, size = 0x2000, scoped, tag = 'output window, operand 0, single buffered']
    %8 = vsyncpa [#allocation3], 0
    %9 = vsyncpa [#allocation6], 0
    %10 = vsyncpa [#allocation4], 0
    // Predicated region
    $region2: #{tpu_custom_call.1} parent=1 // pred_check
      _
    $region3: #{tpu_custom_call.1} parent=1 // pred_check_branch
      %12 = sbr.rel (0) target = $region5
    $region4: #{tpu_custom_call.1} parent=1 // pred_region
      %s14 = ssub.s32 256, 256
      %15 = vsyncadd [#allocation3], %s14
      %s16 = sshll.u32 [#allocation2], 4
      %s17 = int_to_ptr.vmem [resolvable:$true] %s16
      %22 = dma.hbm_to_vmem [thread:$0]  %s0, 256, %s17, [#allocation3], 128, 128, 8
    $region5: #{tpu_custom_call.1} parent=1 // pred_fallthru
      _
    // Predicated region
    $region6: #{tpu_custom_call.1} parent=1 // pred_check
      _
    $region7: #{tpu_custom_call.1} parent=1 // pred_check_branch
      %24 = sbr.rel (0) target = $region9
    $region8: #{tpu_custom_call.1} parent=1 // pred_region
      %s26 = ssub.s32 384, 384
      %27 = vsyncadd [#allocation6], %s26
      %s28 = sshll.u32 [#allocation5], 4
      %s29 = int_to_ptr.vmem [resolvable:$true] %s28
      %34 = dma.hbm_to_vmem [thread:$0]  %s1, 384, %s29, [#allocation6], 128, 128, 8
    $region9: #{tpu_custom_call.1} parent=1 // pred_fallthru
      _
    // Predicated region
    $region10: #{tpu_custom_call.1} parent=1 // pred_check
      _
    $region11: #{tpu_custom_call.1} parent=1 // pred_check_branch
      %36 = sbr.rel (0) target = $region13
    $region12: #{tpu_custom_call.1} parent=1 // pred_region
      _
    $region13: #{tpu_custom_call.1} parent=1 // pred_fallthru
      _
    // Predicated region
    $region14: #{tpu_custom_call.1} parent=1 // pred_check
      _
    $region15: #{tpu_custom_call.1} parent=1 // pred_check_branch
      %38 = sbr.rel (0) target = $region17
    $region16: #{tpu_custom_call.1} parent=1 // pred_region
      %39 = dma.done [#allocation3], 256
    $region17: #{tpu_custom_call.1} parent=1 // pred_fallthru
      _
    // Predicated region
    $region18: #{tpu_custom_call.1} parent=1 // pred_check
      _
    $region19: #{tpu_custom_call.1} parent=1 // pred_check_branch
      %41 = sbr.rel (0) target = $region21
    $region20: #{tpu_custom_call.1} parent=1 // pred_region
      %42 = dma.done [#allocation6], 384
    $region21: #{tpu_custom_call.1} parent=1 // pred_fallthru
      _
    %v43 = vld [vmem:[#allocation2] sm:$0xff]
    %v44 = vld [vmem:[#allocation2 + $0x8] sm:$0xff]
    %v45 = vld [vmem:[#allocation5] sm:$0xff]
    %v46 = vld [vmem:[#allocation5 + $0x8] sm:$0xff]
    %v47 = vld [vmem:[#allocation5 + $0x10] sm:$0xff]
    %v48 = vld [vmem:[%s2] sm:$0x1]
    %v50 = vlaneseq
    %v51 = vshrl.u32 %v50, 7
    %v52 = vsub.s32 0, %v51
    %v53 = vrot.slane %v48, %v52
    %vm55 = vcmask 195584
    %v57 = vsel %vm55, %v43, 0
    %v60 = vsel %vm55, %v44, 0
    %62 = vmatprep.subr.mxu0 0.0
    %63 = vmatpush1.msra.mxu0 %v45
    %64 = vmatprep.subr.mxu0 0.0
    %65 = vmatpush1.msra.mxu0 %v46
    %66 = vmatprep.subr.mxu0 0.0
    %67 = vmatpush1.msra.mxu0 %v47
    %68 = vmatprep.subr.mxu0 0.0
    %69 = vmatpush1.msra.mxu0 0.0
    %70 = vmatprep.subr.mxu0 0.0
    %71 = vmatpush1.msra.mxu0 0.0
    %72 = vmatprep.subr.mxu0 0.0
    %73 = vmatpush1.msra.mxu0 0.0
    %74 = vmatprep.subr.mxu0 0.0
    %75 = vmatpush1.msra.mxu0 0.0
    %76 = vmatprep.subr.mxu0 0.0
    %77 = vmatpush1.msra.mxu0 0.0
    %78 = vmatprep.subr.mxu0 0.0
    %79 = vmatpush1.msra.mxu0 0.0
    %80 = vmatprep.subr.mxu0 0.0
    %81 = vmatpush1.msra.mxu0 0.0
    %82 = vmatprep.subr.mxu0 0.0
    %83 = vmatpush1.msra.mxu0 0.0
    %84 = vmatprep.subr.mxu0 0.0
    %85 = vmatpush1.msra.mxu0 0.0
    %86 = vmatprep.subr.mxu0 0.0
    %87 = vmatpush1.msra.mxu0 0.0
    %88 = vmatprep.subr.mxu0 0.0
    %89 = vmatpush1.msra.mxu0 0.0
    %90 = vmatprep.subr.mxu0 0.0
    %91 = vmatpush1.msra.mxu0 0.0
    %92 = vmatprep.subr.mxu0 0.0
    %93 = vmatpush1.msra.mxu0 0.0
    %94 = vmatprep.subr.mxu0 0.0
    %95 = vmatpush1.msra.mxu0 0.0
    %96 = vmatprep.subr.mxu0 0.0
    %97 = vmatpush1.msra.mxu0 0.0
    %98 = vmatprep.subr.mxu0 0.0
    %99 = vmatpush1.msra.mxu0 0.0
    %100 = vmatprep.subr.mxu0 0.0
    %101 = vmatpush1.msra.mxu0 0.0
    %102 = vmatprep.subr.mxu0 0.0
    %103 = vmatpush1.msra.mxu0 0.0
    %104 = vmatprep.subr.mxu0 0.0
    %105 = vmatpush1.msra.mxu0 0.0
    %106 = vmatprep.subr.mxu0 0.0
    %107 = vmatpush1.msra.mxu0 0.0
    %108 = vmatprep.subr.mxu0 0.0
    %109 = vmatpush1.msra.mxu0 0.0
    %110 = vmatprep.subr.mxu0 0.0
    %111 = vmatpush1.msra.mxu0 0.0
    %112 = vmatprep.subr.mxu0 0.0
    %113 = vmatpush1.msra.mxu0 0.0
    %114 = vmatprep.subr.mxu0 0.0
    %115 = vmatpush1.msra.mxu0 0.0
    %116 = vmatprep.subr.mxu0 0.0
    %117 = vmatpush1.msra.mxu0 0.0
    %118 = vmatprep.subr.mxu0 0.0
    %119 = vmatpush1.msra.mxu0 0.0
    %120 = vmatprep.subr.mxu0 0.0
    %121 = vmatpush1.msra.mxu0 0.0
    %122 = vmatprep.subr.mxu0 0.0
    %123 = vmatpush1.msra.mxu0 0.0
    %124 = vmatprep.subr.mxu0 0.0
    %125 = vmatpush1.msra.mxu0 0.0
    %126 = vmatprep.mubr.f32.mxu0 0.0
    %127 = vmatmul.mubr.f32.gmra.mrb[0].mxu0 %v57
    %v128 = vpop.f32.mrb[0].mxu0
    %v129 = vadd.f32 %v53, %v128
    %v130 = vpop.f32.mrb[0].mxu0
    %131 = vmatprep.mubr.f32.mxu0 0.0
    %132 = vmatmul.mubr.f32.gmra.mrb[0].mxu0 %v60
    %v133 = vpop.f32.mrb[0].mxu0
    %v134 = vadd.f32 %v53, %v133
    %v135 = vpop.f32.mrb[0].mxu0
    %136 = vdwg.mxu0
    %v137 = vmax.f32 %v129, 0.0
    %v138 = vmax.f32 %v134, 0.0
    %139 = vst [vmem:[#allocation7] sm:$0xff] %v137
    %140 = vst [vmem:[#allocation7 + $0x8] sm:$0xff] %v138
    // Predicated region
    $region22: #{tpu_custom_call.1} parent=1 // pred_check
      _
    $region23: #{tpu_custom_call.1} parent=1 // pred_check_branch
      %142 = sbr.rel (0) target = $region25
    $region24: #{tpu_custom_call.1} parent=1 // pred_region
      %s144 = ssub.s32 256, 256
      %145 = vsyncadd [#allocation4], %s144
      %s146 = sshll.u32 [#allocation7], 4
      %s147 = int_to_ptr.vmem [resolvable:$true] %s146
      %152 = dma.vmem_to_hbm [thread:$0]  %s147, 256, %s3, [#allocation4], 128, 128, 8
    $region25: #{tpu_custom_call.1} parent=1 // pred_fallthru
      _
    // Predicated region
    $region26: #{tpu_custom_call.1} parent=1 // pred_check
      _
    $region27: #{tpu_custom_call.1} parent=1 // pred_check_branch
      %154 = sbr.rel (0) target = $region29
    $region28: #{tpu_custom_call.1} parent=1 // pred_region
      %155 = dma.done [#allocation4], 256
    $region29: #{tpu_custom_call.1} parent=1 // pred_fallthru
      _
    %156 = vsyncpa [#allocation3], 1
    %157 = vsyncpa [#allocation6], 1
    %158 = vsyncpa [#allocation4], 1

</llo_original>
